<compile_context>
chip_gen: v6e
topology: v6e:2x2x1
jax: 0.10.0
libtpu: 0.0.40
codegen_flags: <defaults>
</compile_context>

<pallas_src>
import math
from functools import partial

import jax
import jax.numpy as jnp
from jax import lax
from jax.experimental import pallas as pl
from jax.experimental.pallas import tpu as pltpu

_LANE = 128


def _round_up(v: int, m: int) -> int:
    return (v + m - 1) // m * m


def _conv_tile_kernel(x_ref, xh_ref, w_ref, b_ref, o_ref, *,
                      kernel_size, dilation, tile_l):
    """One (batch, L-tile) grid step.

    x_ref : (1, C_in_p, TILE_L)    main input window (compute dtype)
    xh_ref: (1, C_in_p, HALO_BLK)  right halo of the window (compute dtype)
    w_ref : (C_out, K * C_in_p)    fused per-tap weights (compute dtype)
    b_ref : (C_out, 1)             bias (f32)
    o_ref : (1, C_out, TILE_L)     output tile, L on the lane axis
    """
    # Assemble the input window (lane-aligned concat: TILE_L is a 128-multiple).
    window = jnp.concatenate([x_ref[0], xh_ref[0]], axis=-1)   # (C_in_p, TILE_L+H)
    # im2col: K shifted views stacked along the (sublane-aligned) channel axis.
    taps = [window[:, k * dilation:k * dilation + tile_l]
            for k in range(kernel_size)]
    slab = taps[0] if kernel_size == 1 else jnp.concatenate(taps, axis=0)
    # Single fused MXU matmul with f32 accumulation.
    acc = jnp.dot(w_ref[...], slab, preferred_element_type=jnp.float32)
    acc = acc + b_ref[...]                                      # (C_out, TILE_L)
    o_ref[0] = acc.astype(o_ref.dtype)


def causal_dilated_conv1d(x, weight, bias, *, dilation, padding,
                          tile_l=512, compute_dtype=None):
    """Equivalent of nn.Conv1d(C_in, C_out, K, padding=padding, dilation=dilation)(x).

    x:      (N, C_in, L)        NCL, as in PyTorch
    weight: (C_out, C_in, K)    PyTorch Conv1d weight layout
    bias:   (C_out,)
    returns (N, C_out, L_out) with L_out = L + 2*padding - dilation*(K-1)
    """
    N, C_in, L = x.shape
    C_out, C_in_w, K = weight.shape
    assert C_in_w == C_in
    out_dtype = x.dtype
    cdt = jnp.dtype(compute_dtype or x.dtype)

    halo = dilation * (K - 1)
    L_out = L + 2 * padding - halo
    assert L_out > 0, "output length must be positive"

    # ---- tile geometry (multiples of 128 -> good for v5e 128x and v6e/v7x 256x MXU) ----
    tl = min(int(tile_l), _round_up(L_out, _LANE))       # shrink for short sequences
    tl = max(tl, _round_up(max(halo, 1), _LANE))          # one tile must hold the halo
    tl = _round_up(tl, _LANE)
    n_tiles = pl.cdiv(L_out, tl)
    # Halo block: smallest 128-multiple that divides TILE_L and covers the halo.
    hblk = _LANE
    while hblk < halo or tl % hblk:
        hblk += _LANE
    hpt = tl // hblk                                       # halo blocks per tile
    L_alloc = n_tiles * tl + hblk                          # every window stays in bounds
    L_out_alloc = n_tiles * tl                             # output padded to tile multiple

    # ---- operand prep: one pad, weights fused to (C_out, K*C_in_p) ----
    sub = 8 * max(1, 4 // cdt.itemsize)                    # sublane packing: 8 f32 / 16 bf16
    C_in_p = _round_up(C_in, sub)
    x_p = jnp.pad(x, ((0, 0), (0, C_in_p - C_in),
                      (padding, L_alloc - L - padding))).astype(cdt)
    w_f = jnp.pad(jnp.transpose(weight, (0, 2, 1)),        # (C_out, K, C_in)
                  ((0, 0), (0, 0), (0, C_in_p - C_in)))
    w_f = w_f.reshape(C_out, K * C_in_p).astype(cdt)
    b_f = bias.reshape(C_out, 1).astype(jnp.float32)

    kern = partial(_conv_tile_kernel, kernel_size=K, dilation=dilation, tile_l=tl)

    cost = pl.CostEstimate(
        flops=2 * N * L_out * K * C_in * C_out,
        transcendentals=0,
        bytes_accessed=(x_p.nbytes + w_f.nbytes + b_f.nbytes
                        + N * C_out * L_out * jnp.dtype(out_dtype).itemsize))

    out = pl.pallas_call(
        kern,
        out_shape=jax.ShapeDtypeStruct((N, C_out, L_out_alloc), out_dtype),
        grid=(N, n_tiles),
        in_specs=[
            # Main L-tile of the padded input (auto double-buffered).
            pl.BlockSpec((1, C_in_p, tl), lambda b, t: (b, 0, t)),
            # Right halo: first `hblk` samples of the next tile (same array).
            pl.BlockSpec((1, C_in_p, hblk), lambda b, t: (b, 0, (t + 1) * hpt)),
            # Weights / bias: constant index_map -> fetched once, VMEM-resident.
            pl.BlockSpec((C_out, K * C_in_p), lambda b, t: (0, 0)),
            pl.BlockSpec((C_out, 1), lambda b, t: (0, 0)),
        ],
        out_specs=pl.BlockSpec((1, C_out, tl), lambda b, t: (b, 0, t)),
        compiler_params=pltpu.CompilerParams(
            dimension_semantics=("parallel", "parallel"),   # shards over v7x's 2 TCs
            vmem_limit_bytes=48 * 1024 * 1024),              # under v7x 64 MiB physical
        cost_estimate=cost,
    )(x_p, x_p, w_f, b_f)

    if L_out_alloc != L_out:
        # Ragged tail: trim the tile padding.  (For production, keep L_out a
        # multiple of tile_l upstream to avoid this extra output copy.)
        out = out[:, :, :L_out]
    return out


if __name__ == "__main__":
    # Small shapes consistent with CausalDilatedConv1d.__init__.
    N, C_in, C_out, L = 2, 4, 8, 16
    K, dilation, padding = 3, 2, 2          # L_out = 16 + 4 - 4 = 16

    key = jax.random.PRNGKey(0)
    kx, kw, kb = jax.random.split(key, 3)
    bound = 1.0 / math.sqrt(C_in * K)        # nn.Conv1d default init range
    x = jax.random.normal(kx, (N, C_in, L), dtype=jnp.float32)
    weight = jax.random.uniform(kw, (C_out, C_in, K), jnp.float32, -bound, bound)
    bias = jax.random.uniform(kb, (C_out,), jnp.float32, -bound, bound)

    def ref_conv(xa, wa):
        return lax.conv_general_dilated(
            xa, wa, window_strides=(1,), padding=[(padding, padding)],
            rhs_dilation=(dilation,), dimension_numbers=("NCH", "OIH", "NCH"),
            precision=lax.Precision.HIGHEST) + bias[None, :, None]

    L_out = L + 2 * padding - dilation * (K - 1)

    # f32 compute path (matches the PyTorch module's dtype exactly).
    out = jax.block_until_ready(
        causal_dilated_conv1d(x, weight, bias, dilation=dilation, padding=padding))
    assert out.shape == (N, C_out, L_out), out.shape
    err = float(jnp.max(jnp.abs(out - ref_conv(x, weight))))
    assert err < 1e-4, err

    # bf16 compute path (halves HBM traffic; MXU-native, f32 accumulation).
    out_b = jax.block_until_ready(
        causal_dilated_conv1d(x, weight, bias, dilation=dilation, padding=padding,
                              compute_dtype=jnp.bfloat16))
    x_b = x.astype(jnp.bfloat16).astype(jnp.float32)
    w_b = weight.astype(jnp.bfloat16).astype(jnp.float32)
    err_b = float(jnp.max(jnp.abs(out_b - ref_conv(x_b, w_b))))
    assert out_b.shape == (N, C_out, L_out), out_b.shape
    assert err_b < 5e-3, err_b

    print("KERNEL_OK")
</pallas_src>

<mosaic_0001>
module attributes {stable_mosaic.version = 11 : i64} {
  func.func @_conv_tile_kernel(%arg0: i32, %arg1: i32, %arg2: memref<1x8x128xf32, #tpu.memory_space<vmem>>, %arg3: memref<1x8x128xf32, #tpu.memory_space<vmem>>, %arg4: memref<8x24xf32, #tpu.memory_space<vmem>>, %arg5: memref<8x1xf32, #tpu.memory_space<vmem>>, %arg6: memref<1x8x128xf32, #tpu.memory_space<vmem>>) attributes {dimension_semantics = [#tpu.dimension_semantics<parallel>, #tpu.dimension_semantics<parallel>], iteration_bounds = array<i64: 2, 1>, scalar_prefetch = 0 : i64, scratch_operands = 0 : i64, tpu.core_type = #tpu.core_type<tc>, window_params = [{transform_indices = @transform_0, window_bounds = array<i64: 1, 8, 128>}, {transform_indices = @transform_1, window_bounds = array<i64: 1, 8, 128>}, {pipeline_mode = #tpu.pipeline_mode<synchronous>, transform_indices = @transform_2, window_bounds = array<i64: 8, 24>}, {pipeline_mode = #tpu.pipeline_mode<synchronous>, transform_indices = @transform_3, window_bounds = array<i64: 8, 1>}, {transform_indices = @transform_4, window_bounds = array<i64: 1, 8, 128>}]} {
    %c0 = arith.constant 0 : index
    %c0_0 = arith.constant 0 : index
    %c0_1 = arith.constant 0 : index
    %0 = vector.load %arg2[%c0, %c0_0, %c0_1] : memref<1x8x128xf32, #tpu.memory_space<vmem>>, vector<1x8x128xf32>
    %1 = vector.shape_cast %0 : vector<1x8x128xf32> to vector<8x128xf32>
    %c0_2 = arith.constant 0 : index
    %c0_3 = arith.constant 0 : index
    %c0_4 = arith.constant 0 : index
    %2 = vector.load %arg3[%c0_2, %c0_3, %c0_4] : memref<1x8x128xf32, #tpu.memory_space<vmem>>, vector<1x8x128xf32>
    %3 = vector.shape_cast %2 : vector<1x8x128xf32> to vector<8x128xf32>
    %4 = tpu.concatenate %1, %3 in 1 : vector<8x128xf32>, vector<8x128xf32> -> vector<8x256xf32>
    %5 = vector.extract_strided_slice %4 {offsets = [0, 0], sizes = [8, 128], strides = [1, 1]} : vector<8x256xf32> to vector<8x128xf32>
    %6 = vector.extract_strided_slice %4 {offsets = [0, 2], sizes = [8, 128], strides = [1, 1]} : vector<8x256xf32> to vector<8x128xf32>
    %7 = vector.extract_strided_slice %4 {offsets = [0, 4], sizes = [8, 128], strides = [1, 1]} : vector<8x256xf32> to vector<8x128xf32>
    %8 = tpu.concatenate %5, %6, %7 in 0 : vector<8x128xf32>, vector<8x128xf32>, vector<8x128xf32> -> vector<24x128xf32>
    %c0_5 = arith.constant 0 : index
    %c0_6 = arith.constant 0 : index
    %9 = vector.load %arg4[%c0_5, %c0_6] : memref<8x24xf32, #tpu.memory_space<vmem>>, vector<8x24xf32>
    %cst = arith.constant dense<0.000000e+00> : vector<8x128xf32>
    %10 = tpu.matmul %9, %8, %cst {dimension_numbers = #tpu.dot_dimension_numbers<[1], [0], [0], [1], [0, 0, 1, 1], [], []>} : vector<8x24xf32>, vector<24x128xf32>, vector<8x128xf32> -> vector<8x128xf32>
    %c0_7 = arith.constant 0 : index
    %c0_8 = arith.constant 0 : index
    %11 = vector.load %arg5[%c0_7, %c0_8] : memref<8x1xf32, #tpu.memory_space<vmem>>, vector<8x1xf32>
    %12 = vector.broadcast %11 : vector<8x1xf32> to vector<8x128xf32>
    %13 = arith.addf %10, %12 : vector<8x128xf32>
    %c0_9 = arith.constant 0 : index
    %c0_10 = arith.constant 0 : index
    %c0_11 = arith.constant 0 : index
    %14 = vector.load %arg6[%c0_9, %c0_10, %c0_11] : memref<1x8x128xf32, #tpu.memory_space<vmem>>, vector<1x8x128xf32>
    %15 = vector.shape_cast %14 : vector<1x8x128xf32> to vector<8x128xf32>
    %16 = vector.shape_cast %13 : vector<8x128xf32> to vector<1x8x128xf32>
    tpu.vector_store %arg6[%c0_9, %c0_10, %c0_11], %16 {strides = array<i32>} : memref<1x8x128xf32, #tpu.memory_space<vmem>>, vector<1x8x128xf32>,
    return
  }
  func.func @transform_0(%arg0: i32, %arg1: i32) -> (i32, i32, i32) {
    %c0_i32 = arith.constant 0 : i32
    %c0_i32_0 = arith.constant 0 : i32
    return %arg0, %c0_i32, %arg1 : i32, i32, i32
  }
  func.func @transform_1(%arg0: i32, %arg1: i32) -> (i32, i32, i32) {
    %c1_i32 = arith.constant 1 : i32
    %0 = arith.addi %arg1, %c1_i32 : i32
    %c1_i32_0 = arith.constant 1 : i32
    %1 = arith.muli %0, %c1_i32_0 : i32
    %c0_i32 = arith.constant 0 : i32
    %c0_i32_1 = arith.constant 0 : i32
    return %arg0, %c0_i32, %1 : i32, i32, i32
  }
  func.func @transform_2(%arg0: i32, %arg1: i32) -> (i32, i32) {
    %c0_i32 = arith.constant 0 : i32
    %c0_i32_0 = arith.constant 0 : i32
    %c0_i32_1 = arith.constant 0 : i32
    return %c0_i32, %c0_i32_0 : i32, i32
  }
  func.func @transform_3(%arg0: i32, %arg1: i32) -> (i32, i32) {
    %c0_i32 = arith.constant 0 : i32
    %c0_i32_0 = arith.constant 0 : i32
    %c0_i32_1 = arith.constant 0 : i32
    return %c0_i32, %c0_i32_0 : i32, i32
  }
  func.func @transform_4(%arg0: i32, %arg1: i32) -> (i32, i32, i32) {
    %c0_i32 = arith.constant 0 : i32
    %c0_i32_0 = arith.constant 0 : i32
    return %arg0, %c0_i32, %arg1 : i32, i32, i32
  }
}

</mosaic_0001>

<llo_original>
// kernel: tpu_custom_call.1
$region0: #{tpu_custom_call.1}
  #allocation0 [shape = 'u32[]', space=smem, size = 0x4, offset = 0x4, fixed_abs, tag = 'smem constant byte address 0x4 - core index']
  #allocation1 [shape = 'u32[144,128]{1,0:T(1,128)}', space=vmem, size = 0x12000, scoped, tag = 'internal scratch']
  %s0 = inlined_call_operand.hbm [shape: f32[2,8,256], index: 0, kind: input, shape index: {}]
  %s1 = inlined_call_operand.hbm [shape: f32[2,8,256], index: 1, kind: input, shape index: {}]
  %s2 = inlined_call_operand.vmem [shape: f32[8,24], index: 2, kind: input, shape index: {}]
  %s3 = inlined_call_operand.vmem [shape: f32[8,1], index: 3, kind: input, shape index: {}]
  %s4 = inlined_call_operand.hbm [shape: f32[2,8,128], index: 4, kind: output, shape index: {}]
  %s5 = sld [smem:[#allocation0]]
  $region57: #{tpu_custom_call.1} parent=0
    _
  %s7 = ssub.s32 1, %s5
  %s8 = scalar_select 0, %s7, %s5
  $region1: #{tpu_custom_call.1} parent=0
    #allocation2 [shape = 'u8[8192]{0}', space=vmem, size = 0x2000, scoped, tag = 'input window, operand 0']
    #allocation3 [shape = 's32[2]{0}', space=sflag, size = 0x8, scoped, tag = 'scoped memory for tpu_custom_call.1']
    #allocation4 [shape = 's32[2]{0}', space=sflag, size = 0x8, scoped, tag = 'scoped memory for tpu_custom_call.1']
    #allocation5 [shape = 'u8[8192]{0}', space=vmem, size = 0x2000, scoped, tag = 'input window, operand 1']
    #allocation6 [shape = 's32[2]{0}', space=sflag, size = 0x8, scoped, tag = 'scoped memory for tpu_custom_call.1']
    #allocation7 [shape = 'u8[8192]{0}', space=vmem, size = 0x2000, scoped, tag = 'output window, operand 0']
    %9 = vsyncpa [#allocation3], 0
    %s10 = scalar_lea.sflag [#allocation3], 1
    %11 = vsyncpa %s10, 0
    %12 = vsyncpa [#allocation6], 0
    %s13 = scalar_lea.sflag [#allocation6], 1
    %14 = vsyncpa %s13, 0
    %15 = vsyncpa [#allocation4], 0
    %s16 = scalar_lea.sflag [#allocation4], 1
    %17 = vsyncpa %s16, 0
    loop: start=0, step=1, limit=4
    $region2: #{tpu_custom_call.1} parent=1 // loop_pre_header
      _
    $region3: #{tpu_custom_call.1} parent=1 // loop_header
      %s19 = sphi 0, %s23
      %p20 = scmp.ge.s32.totalorder %s19, 4
      %s26 = sphi 0, %s38
      %s27 = sphi 0, %s34
      %s28 = sphi 0, %s26
      %s29 = sphi 0, %s27
      %s30 = sphi 0, %s28
      %s31 = sphi 0, %s29
      %s43 = sphi 0, %s45
      %s46 = sphi 0, %s43
      %s47 = sphi 0, %s46
      %s63 = sphi 0, %s47
      %s73 = sphi 0, %s75
      %s76 = sphi 0, %s73
      %s77 = sphi 0, %s76
      %s93 = sphi 0, %s77
      %s97 = sphi 0, %s97
      %s99 = sphi 0, %s97
      %s100 = sphi 0, %s99
      %s114 = sphi 0, %s100
      %s118 = sphi 0, %s118
      %s120 = sphi 0, %s118
      %s121 = sphi 0, %s120
      %s135 = sphi 0, %s121
      %s143 = sphi 0, %s145
      %s146 = sphi 0, %s143
      %s147 = sphi 0, %s146
      %s163 = sphi 0, %s147
    $region4: #{tpu_custom_call.1} parent=1 // loop_header_branch
      %22 = sbr.rel (%p20) target = $region8
    $region5: #{tpu_custom_call.1} parent=1 // loop_body
      %s24 = ssub.s32 %s19, 1
      %s25 = ssub.s32 %s19, 2
      %s32 = sadd.s32 1, %s27
      %p33 = scmp.ge.s32.totalorder %s32, 1
      %s34 = scalar_select %p33, 0, %s32
      %s35 = sadd.s32 1, %s26
      %s36 = scalar_select %p33, %s35, %s26
      %p37 = scmp.ge.s32.totalorder %s36, 2
      %s38 = scalar_select %p37, 0, %s36
      %s39 = ssub.s32 %s26, %s38
      %s40 = ssub.s32 %s27, %s34
      %s41 = sor.u32 %s39, %s40
      %p42 = scmp.eq.s32.totalorder %s41, 0
      %s44 = sadd.s32 %s43, 1
      %s45 = scalar_select %p42, %s43, %s44
      %p48 = pneg %p42
      %p49 = scmp.eq.s32.totalorder %s19, 1
      %p50 = por %p48, %p49
      %p51 = scmp.ne.s32.totalorder %s43, %s46
      %p52 = scmp.eq.s32.totalorder %s19, 0
      %p53 = por %p51, %p52
      %p54 = scmp.ne.s32.totalorder %s43, %s46
      %p55 = scmp.eq.s32.totalorder %s24, 1
      %p56 = por %p54, %p55
      %p57 = scmp.ne.s32.totalorder %s46, %s47
      %p58 = scmp.eq.s32.totalorder %s24, 0
      %p59 = por %p57, %p58
      %p60 = scmp.ne.s32.totalorder %s46, %s47
      %p61 = scmp.eq.s32.totalorder %s25, 1
      %p62 = por %p60, %p61
      %p64 = scmp.ne.s32.totalorder %s47, %s63
      %p65 = scmp.eq.s32.totalorder %s25, 0
      %p66 = por %p64, %p65
      %s67 = sadd.s32 %s27, 1
      %s68 = sadd.s32 %s34, 1
      %s69 = ssub.s32 %s26, %s38
      %s70 = ssub.s32 %s67, %s68
      %s71 = sor.u32 %s69, %s70
      %p72 = scmp.eq.s32.totalorder %s71, 0
      %s74 = sadd.s32 %s73, 1
      %s75 = scalar_select %p72, %s73, %s74
      %p78 = pneg %p72
      %p79 = scmp.eq.s32.totalorder %s19, 1
      %p80 = por %p78, %p79
      %p81 = scmp.ne.s32.totalorder %s73, %s76
      %p82 = scmp.eq.s32.totalorder %s19, 0
      %p83 = por %p81, %p82
      %p84 = scmp.ne.s32.totalorder %s73, %s76
      %p85 = scmp.eq.s32.totalorder %s24, 1
      %p86 = por %p84, %p85
      %p87 = scmp.ne.s32.totalorder %s76, %s77
      %p88 = scmp.eq.s32.totalorder %s24, 0
      %p89 = por %p87, %p88
      %p90 = scmp.ne.s32.totalorder %s76, %s77
      %p91 = scmp.eq.s32.totalorder %s25, 1
      %p92 = por %p90, %p91
      %p94 = scmp.ne.s32.totalorder %s77, %s93
      %p95 = scmp.eq.s32.totalorder %s25, 0
      %p96 = por %p94, %p95
      %s98 = sadd.s32 %s97, 1
      %p101 = scmp.eq.s32.totalorder %s19, 1
      %p102 = scmp.ne.s32.totalorder %s97, %s99
      %p103 = scmp.eq.s32.totalorder %s19, 0
      %p104 = por %p102, %p103
      %p105 = scmp.ne.s32.totalorder %s97, %s99
      %p106 = scmp.eq.s32.totalorder %s24, 1
      %p107 = por %p105, %p106
      %p108 = scmp.ne.s32.totalorder %s99, %s100
      %p109 = scmp.eq.s32.totalorder %s24, 0
      %p110 = por %p108, %p109
      %p111 = scmp.ne.s32.totalorder %s99, %s100
      %p112 = scmp.eq.s32.totalorder %s25, 1
      %p113 = por %p111, %p112
      %p115 = scmp.ne.s32.totalorder %s100, %s114
      %p116 = scmp.eq.s32.totalorder %s25, 0
      %p117 = por %p115, %p116
      %s119 = sadd.s32 %s118, 1
      %p122 = scmp.eq.s32.totalorder %s19, 1
      %p123 = scmp.ne.s32.totalorder %s118, %s120
      %p124 = scmp.eq.s32.totalorder %s19, 0
      %p125 = por %p123, %p124
      %p126 = scmp.ne.s32.totalorder %s118, %s120
      %p127 = scmp.eq.s32.totalorder %s24, 1
      %p128 = por %p126, %p127
      %p129 = scmp.ne.s32.totalorder %s120, %s121
      %p130 = scmp.eq.s32.totalorder %s24, 0
      %p131 = por %p129, %p130
      %p132 = scmp.ne.s32.totalorder %s120, %s121
      %p133 = scmp.eq.s32.totalorder %s25, 1
      %p134 = por %p132, %p133
      %p136 = scmp.ne.s32.totalorder %s121, %s135
      %p137 = scmp.eq.s32.totalorder %s25, 0
      %p138 = por %p136, %p137
      %s139 = ssub.s32 %s26, %s38
      %s140 = ssub.s32 %s27, %s34
      %s141 = sor.u32 %s139, %s140
      %p142 = scmp.eq.s32.totalorder %s141, 0
      %s144 = sadd.s32 %s143, 1
      %s145 = scalar_select %p142, %s143, %s144
      %p148 = pneg %p142
      %p149 = scmp.eq.s32.totalorder %s19, 1
      %p150 = por %p148, %p149
      %p151 = scmp.ne.s32.totalorder %s143, %s146
      %p152 = scmp.eq.s32.totalorder %s19, 0
      %p153 = por %p151, %p152
      %p154 = scmp.ne.s32.totalorder %s143, %s146
      %p155 = scmp.eq.s32.totalorder %s24, 1
      %p156 = por %p154, %p155
      %p157 = scmp.ne.s32.totalorder %s146, %s147
      %p158 = scmp.eq.s32.totalorder %s24, 0
      %p159 = por %p157, %p158
      %p160 = scmp.ne.s32.totalorder %s146, %s147
      %p161 = scmp.eq.s32.totalorder %s25, 1
      %p162 = por %p160, %p161
      %p164 = scmp.ne.s32.totalorder %s147, %s163
      %p165 = scmp.eq.s32.totalorder %s25, 0
      %p166 = por %p164, %p165
      %p167 = scmp.le.s32.totalorder 1, %s19
      %p168 = scmp.lt.s32.totalorder %s19, 3
      %p169 = pnand %p167, %p168
      %p170 = pneg %p169
      // Predicated region
      $region9: #{tpu_custom_call.1} parent=5 // pred_check
        _
      $region10: #{tpu_custom_call.1} parent=5 // pred_check_branch
        %172 = sbr.rel (%p169) target = $region12
      $region11: #{tpu_custom_call.1} parent=5 // pred_region
        %s173 = ssub.s32 %s19, 1
        // Predicated region
        $region13: #{tpu_custom_call.1} parent=11 // pred_check
          %p174 = pneg %p110
        $region14: #{tpu_custom_call.1} parent=11 // pred_check_branch
          %176 = sbr.rel (%p174) target = $region16
        $region15: #{tpu_custom_call.1} parent=11 // pred_region
          _
        $region16: #{tpu_custom_call.1} parent=11 // pred_fallthru
          _
        // Predicated region
        $region17: #{tpu_custom_call.1} parent=11 // pred_check
          %p177 = pneg %p131
        $region18: #{tpu_custom_call.1} parent=11 // pred_check_branch
          %179 = sbr.rel (%p177) target = $region20
        $region19: #{tpu_custom_call.1} parent=11 // pred_region
          _
        $region20: #{tpu_custom_call.1} parent=11 // pred_fallthru
          _
      $region12: #{tpu_custom_call.1} parent=5 // pred_fallthru
        _
      %p180 = scmp.lt.s32.totalorder %s19, 2
      // Predicated region
      $region21: #{tpu_custom_call.1} parent=5 // pred_check
        %p181 = pneg %p180
      $region22: #{tpu_custom_call.1} parent=5 // pred_check_branch
        %183 = sbr.rel (%p181) target = $region24
      $region23: #{tpu_custom_call.1} parent=5 // pred_region
        // Predicated region
        $region25: #{tpu_custom_call.1} parent=23 // pred_check
          %p184 = pneg %p53
        $region26: #{tpu_custom_call.1} parent=23 // pred_check_branch
          %186 = sbr.rel (%p184) target = $region28
        $region27: #{tpu_custom_call.1} parent=23 // pred_region
          %s187 = sand.u32 %s43, 1
          %s188 = scalar_lea.sflag [#allocation3], %s187
          %s189 = sand.u32 %s43, 1
          %s190 = smul.addr %s189, 8
          %s191 = scalar_lea.vmem [#allocation2], %s190
          %s193 = ssub.s32 128, 128
          %194 = vsyncadd %s188, %s193
          %s195 = smul.addr %s26, 2
          %s196 = sadd.s32 %s27, %s195
          %s197 = smul.addr %s196, 128
          %s198 = scalar_lea.hbm %s0, %s197
          %s200 = sshll.u32 %s191, 4
          %s201 = int_to_ptr.vmem [resolvable:$true] %s200
          %203 = dma.hbm_to_vmem [thread:$0]  %s198, 128, %s201, %s188
        $region28: #{tpu_custom_call.1} parent=23 // pred_fallthru
          _
        // Predicated region
        $region29: #{tpu_custom_call.1} parent=23 // pred_check
          %p204 = pneg %p83
        $region30: #{tpu_custom_call.1} parent=23 // pred_check_branch
          %206 = sbr.rel (%p204) target = $region32
        $region31: #{tpu_custom_call.1} parent=23 // pred_region
          %s207 = sand.u32 %s73, 1
          %s208 = scalar_lea.sflag [#allocation6], %s207
          %s209 = sand.u32 %s73, 1
          %s210 = smul.addr %s209, 8
          %s211 = scalar_lea.vmem [#allocation5], %s210
          %s212 = sadd.s32 %s27, 1
          %s214 = ssub.s32 128, 128
          %215 = vsyncadd %s208, %s214
          %s216 = smul.addr %s26, 2
          %s217 = sadd.s32 %s212, %s216
          %s218 = smul.addr %s217, 128
          %s219 = scalar_lea.hbm %s1, %s218
          %s221 = sshll.u32 %s211, 4
          %s222 = int_to_ptr.vmem [resolvable:$true] %s221
          %224 = dma.hbm_to_vmem [thread:$0]  %s219, 128, %s222, %s208
        $region32: #{tpu_custom_call.1} parent=23 // pred_fallthru
          _
      $region24: #{tpu_custom_call.1} parent=5 // pred_fallthru
        _
      %p225 = scmp.le.s32.totalorder 1, %s19
      %p226 = scmp.lt.s32.totalorder %s19, 3
      %p227 = pnand %p225, %p226
      %p228 = pneg %p227
      // Predicated region
      $region33: #{tpu_custom_call.1} parent=5 // pred_check
        _
      $region34: #{tpu_custom_call.1} parent=5 // pred_check_branch
        %230 = sbr.rel (%p227) target = $region36
      $region35: #{tpu_custom_call.1} parent=5 // pred_region
        %s231 = ssub.s32 %s19, 1
        %s232 = sand.u32 %s46, 1
        %s233 = scalar_lea.sflag [#allocation3], %s232
        %s234 = sand.u32 %s46, 1
        %s235 = smul.addr %s234, 8
        %s236 = scalar_lea.vmem [#allocation2], %s235
        // Predicated region
        $region37: #{tpu_custom_call.1} parent=35 // pred_check
          %p237 = pneg %p59
        $region38: #{tpu_custom_call.1} parent=35 // pred_check_branch
          %239 = sbr.rel (%p237) target = $region40
        $region39: #{tpu_custom_call.1} parent=35 // pred_region
          %240 = dma.done %s233, 128
        $region40: #{tpu_custom_call.1} parent=35 // pred_fallthru
          _
        %s241 = sand.u32 %s76, 1
        %s242 = scalar_lea.sflag [#allocation6], %s241
        %s243 = sand.u32 %s76, 1
        %s244 = smul.addr %s243, 8
        %s245 = scalar_lea.vmem [#allocation5], %s244
        // Predicated region
        $region41: #{tpu_custom_call.1} parent=35 // pred_check
          %p246 = pneg %p89
        $region42: #{tpu_custom_call.1} parent=35 // pred_check_branch
          %248 = sbr.rel (%p246) target = $region44
        $region43: #{tpu_custom_call.1} parent=35 // pred_region
          %249 = dma.done %s242, 128
        $region44: #{tpu_custom_call.1} parent=35 // pred_fallthru
          _
        %s250 = sand.u32 %s46, 1
        %s251 = scalar_lea.sflag [#allocation3], %s250
        %s252 = sand.u32 %s46, 1
        %s253 = smul.addr %s252, 8
        %s254 = scalar_lea.vmem [#allocation2], %s253
        %p255 = pneg %p59
        %p256 = pneg %p56
        %s257 = sand.u32 %s76, 1
        %s258 = scalar_lea.sflag [#allocation6], %s257
        %s259 = sand.u32 %s76, 1
        %s260 = smul.addr %s259, 8
        %s261 = scalar_lea.vmem [#allocation5], %s260
        %p262 = pneg %p89
        %p263 = pneg %p86
        %p264 = pneg %p110
        %p265 = pneg %p107
        %p266 = pneg %p131
        %p267 = pneg %p128
        %p268 = pneg %p159
        %p269 = pneg %p156
        %s270 = sand.u32 %s146, 1
        %s271 = scalar_lea.sflag [#allocation4], %s270
        %s272 = sand.u32 %s146, 1
        %s273 = smul.addr %s272, 8
        %s274 = scalar_lea.vmem [#allocation7], %s273
        %s275 = sadd.s32 %s29, 1
        %v276 = vld [vmem:[%s236] sm:$0xff]
        %v277 = vld [vmem:[%s245] sm:$0xff]
        %280 = vrot.lane.b32.xlu0 %v276, 126
        %v281 = vpop.permute.xlu0 %280
        %282 = vrot.lane.b32.xlu0 %v277, 126
        %v283 = vpop.permute.xlu0 %282
        %vm284 = vcmask 1031168
        %v285 = vsel %vm284, %v281, %v283
        %287 = vrot.lane.b32.xlu0 %v276, 124
        %v288 = vpop.permute.xlu0 %287
        %289 = vrot.lane.b32.xlu0 %v277, 124
        %v290 = vpop.permute.xlu0 %289
        %vm291 = vcmask 1014784
        %v292 = vsel %vm291, %v288, %v290
        %v294 = vld [vmem:[%s2] sm:$0xff]
        %v295 = vld [vmem:[%s3] sm:$0xff]
        %297 = vset.pattern.permute.xlu0 0
        %298 = vperm.xlu0 %297, %v295
        %v299 = vpop.permute.xlu0 %298
        %vm301 = vcmask 195584
        %v303 = vsel %vm301, %v294, 0
        %305 = vmatprep.subr.mxu0 0.0
        %306 = vmatpush1.msra.mxu0 0.0
        %307 = vmatprep.subr.mxu0 0.0
        %308 = vmatpush1.msra.mxu0 0.0
        %309 = vmatprep.subr.mxu0 0.0
        %310 = vmatpush1.msra.mxu0 0.0
        %311 = vmatprep.subr.mxu0 0.0
        %312 = vmatpush1.msra.mxu0 0.0
        %313 = vmatprep.subr.mxu0 0.0
        %314 = vmatpush1.msra.mxu0 0.0
        %315 = vmatprep.subr.mxu0 0.0
        %316 = vmatpush1.msra.mxu0 0.0
        %317 = vmatprep.subr.mxu0 0.0
        %318 = vmatpush1.msra.mxu0 0.0
        %319 = vmatprep.subr.mxu0 0.0
        %320 = vmatpush1.msra.mxu0 0.0
        %321 = vmatprep.subr.mxu0 0.0
        %322 = vmatpush1.msra.mxu0 0.0
        %323 = vmatprep.subr.mxu0 0.0
        %324 = vmatpush1.msra.mxu0 0.0
        %325 = vmatprep.subr.mxu0 0.0
        %326 = vmatpush1.msra.mxu0 0.0
        %327 = vmatprep.subr.mxu0 0.0
        %328 = vmatpush1.msra.mxu0 0.0
        %329 = vmatprep.subr.mxu0 0.0
        %330 = vmatpush1.msra.mxu0 0.0
        %331 = vmatprep.subr.mxu0 0.0
        %332 = vmatpush1.msra.mxu0 %v292
        %333 = vmatprep.subr.mxu0 0.0
        %334 = vmatpush1.msra.mxu0 %v285
        %335 = vmatprep.subr.mxu0 0.0
        %336 = vmatpush1.msra.mxu0 %v276
        %337 = vmatprep.subr.mxu0 0.0
        %338 = vmatpush2.msra.mxu0 0.0
        %339 = vmatprep.subr.mxu0 0.0
        %340 = vmatpush2.msra.mxu0 0.0
        %341 = vmatprep.subr.mxu0 0.0
        %342 = vmatpush2.msra.mxu0 0.0
        %343 = vmatprep.subr.mxu0 0.0
        %344 = vmatpush2.msra.mxu0 0.0
        %345 = vmatprep.subr.mxu0 0.0
        %346 = vmatpush2.msra.mxu0 0.0
        %347 = vmatprep.subr.mxu0 0.0
        %348 = vmatpush2.msra.mxu0 0.0
        %349 = vmatprep.subr.mxu0 0.0
        %350 = vmatpush2.msra.mxu0 0.0
        %351 = vmatprep.subr.mxu0 0.0
        %352 = vmatpush2.msra.mxu0 0.0
        %353 = vmatprep.subr.mxu0 0.0
        %354 = vmatpush2.msra.mxu0 0.0
        %355 = vmatprep.subr.mxu0 0.0
        %356 = vmatpush2.msra.mxu0 0.0
        %357 = vmatprep.subr.mxu0 0.0
        %358 = vmatpush2.msra.mxu0 0.0
        %359 = vmatprep.subr.mxu0 0.0
        %360 = vmatpush2.msra.mxu0 0.0
        %361 = vmatprep.subr.mxu0 0.0
        %362 = vmatpush2.msra.mxu0 0.0
        %363 = vmatprep.subr.mxu0 0.0
        %364 = vmatpush2.msra.mxu0 0.0
        %365 = vmatprep.subr.mxu0 0.0
        %366 = vmatpush2.msra.mxu0 0.0
        %367 = vmatprep.subr.mxu0 0.0
        %368 = vmatpush2.msra.mxu0 0.0
        %369 = vmatprep.mubr.f32.mxu0 0.0
        %370 = vmatmul.mubr.f32.gmra.mxu0 %v303
        %v371 = vpop.f32.mrf.mxu0
        %v372 = vadd.f32 %v299, %v371
        %v373 = vpop.f32.mrf.mxu0
        %374 = vdwg.mxu0
        %375 = vst [vmem:[%s274] sm:$0xff] %v372
        %s376 = sand.u32 %s146, 1
        %s377 = scalar_lea.sflag [#allocation4], %s376
        %s378 = sand.u32 %s146, 1
        %s379 = smul.addr %s378, 8
        %s380 = scalar_lea.vmem [#allocation7], %s379
        // Predicated region
        $region45: #{tpu_custom_call.1} parent=35 // pred_check
          %p381 = pneg %p156
        $region46: #{tpu_custom_call.1} parent=35 // pred_check_branch
          %383 = sbr.rel (%p381) target = $region48
        $region47: #{tpu_custom_call.1} parent=35 // pred_region
          %s385 = ssub.s32 128, 128
          %386 = vsyncadd %s377, %s385
          %s387 = sadd.s32 %s29, %s28
          %s388 = smul.addr %s387, 128
          %s389 = scalar_lea.hbm %s4, %s388
          %s391 = sshll.u32 %s380, 4
          %s392 = int_to_ptr.vmem [resolvable:$true] %s391
          %394 = dma.vmem_to_hbm [thread:$0]  %s392, 128, %s389, %s377
        $region48: #{tpu_custom_call.1} parent=35 // pred_fallthru
          _
      $region36: #{tpu_custom_call.1} parent=5 // pred_fallthru
        _
      %p395 = scmp.le.s32.totalorder 2, %s19
      // Predicated region
      $region49: #{tpu_custom_call.1} parent=5 // pred_check
        %p396 = pneg %p395
      $region50: #{tpu_custom_call.1} parent=5 // pred_check_branch
        %398 = sbr.rel (%p396) target = $region52
      $region51: #{tpu_custom_call.1} parent=5 // pred_region
        %s399 = ssub.s32 %s19, 2
        // Predicated region
        $region53: #{tpu_custom_call.1} parent=51 // pred_check
          %p400 = pneg %p162
        $region54: #{tpu_custom_call.1} parent=51 // pred_check_branch
          %402 = sbr.rel (%p400) target = $region56
        $region55: #{tpu_custom_call.1} parent=51 // pred_region
          %s403 = sand.u32 %s147, 1
          %s404 = scalar_lea.sflag [#allocation4], %s403
          %s405 = sand.u32 %s147, 1
          %s406 = smul.addr %s405, 8
          %s407 = scalar_lea.vmem [#allocation7], %s406
          %408 = dma.done %s404, 128
        $region56: #{tpu_custom_call.1} parent=51 // pred_fallthru
          _
      $region52: #{tpu_custom_call.1} parent=5 // pred_fallthru
        _
    $region6: #{tpu_custom_call.1} parent=1 // loop_footer
      %s23 = sadd.s32 1, %s19
    $region7: #{tpu_custom_call.1} parent=1 // loop_footer_branch
      %18 = sbr.rel target = $region3
    $region8: #{tpu_custom_call.1} parent=1 // loop_exit
      _
    %409 = vsyncpa [#allocation3], 1
    %s410 = scalar_lea.sflag [#allocation3], 1
    %411 = vsyncpa %s410, 1
    %412 = vsyncpa [#allocation6], 1
    %s413 = scalar_lea.sflag [#allocation6], 1
    %414 = vsyncpa %s413, 1
    %415 = vsyncpa [#allocation4], 1
    %s416 = scalar_lea.sflag [#allocation4], 1
    %417 = vsyncpa %s416, 1

</llo_original>
